<compile_context>
chip_gen: v7x
topology: tpu7x:2x2x1
jax: 0.10.0
libtpu: 0.0.40
codegen_flags: <defaults>
</compile_context>

<pallas_src>
import functools

import jax
import jax.numpy as jnp
from jax.experimental import pallas as pl
from jax.experimental.pallas import tpu as pltpu  # noqa: F401  (TPU backend)

# Problem dims from the PyTorch module.
D_IN, D_HID, D_OUT = 49, 7, 22
# Lane-dense padded dims (last dim multiple of 128 -> unmasked vld/vst, full vregs).
K_PAD, HID_PAD, OUT_PAD = 128, 128, 128


def _mlp_softmax_kernel(x_ref, w1_ref, b1_ref, w2_ref, b2_ref, o_ref, *, n_valid):
    b_pad = x_ref.shape[0]
    x = x_ref[...]                                               # (B_pad, 128), cols >= 49 are zero

    # Layer 1 on the MXU: (B,128) @ (128,128). Zero-padded K rows / hidden cols
    # contribute nothing, so the result matches the unpadded matmul exactly.
    h = jnp.dot(x, w1_ref[...], preferred_element_type=jnp.float32) + b1_ref[...]
    h = jnp.where(h > 0, h, 0.01 * h)                            # LeakyReLU (slope 0.01)

    # Layer 2 on the VPU: K=7 contraction as 7 unrolled broadcast multiply-adds.
    y = jnp.broadcast_to(b2_ref[...], (b_pad, OUT_PAD))
    for k in range(D_HID):                                       # static unroll, 7 iters
        y = y + h[:, k:k + 1] * w2_ref[k:k + 1, :]

    # Softmax over dim=0 (batch axis), numerically stabilized.  If the batch was
    # sublane-padded, exclude the padded rows from max/sum (static at trace time,
    # so the aligned case emits no masking code at all).
    if n_valid != b_pad:
        row_ids = jax.lax.broadcasted_iota(jnp.int32, (b_pad, OUT_PAD), 0)
        y = jnp.where(row_ids < n_valid, y, jnp.finfo(jnp.float32).min)

    m = jnp.max(y, axis=0, keepdims=True)
    e = jnp.exp(y - m)
    denom = jnp.sum(e, axis=0, keepdims=True)
    inv = pl.reciprocal(denom, approx=True)                      # EUP slot (frees VALU)
    inv = inv * (2.0 - denom * inv)                              # one Newton step -> ~f32 exact
    o_ref[...] = (e * inv).astype(o_ref.dtype)                   # lane-dense unmasked store


def transduction_v_forward(x, w1, b1, w2, b2):
    """x: (B, 49) f32. w1: (7, 49), b1: (7,), w2: (22, 7), b2: (22,). Returns (B, 22)."""
    B = x.shape[0]
    B_pad = ((B + 7) // 8) * 8                                   # sublane-align the batch
    f32 = jnp.float32

    # One-time host/XLA-side zero padding to lane-dense shapes (outside the hot path).
    x_p = jnp.zeros((B_pad, K_PAD), f32).at[:B, :D_IN].set(x.astype(f32))
    w1_p = jnp.zeros((K_PAD, HID_PAD), f32).at[:D_IN, :D_HID].set(w1.T.astype(f32))
    b1_p = jnp.zeros((1, HID_PAD), f32).at[0, :D_HID].set(b1.astype(f32))
    w2_p = jnp.zeros((8, OUT_PAD), f32).at[:D_HID, :D_OUT].set(w2.T.astype(f32))  # sublane-pad 7->8
    b2_p = jnp.zeros((1, OUT_PAD), f32).at[0, :D_OUT].set(b2.astype(f32))

    cost = pl.CostEstimate(
        flops=2 * B * (D_IN * D_HID + D_HID * D_OUT),
        transcendentals=B * D_OUT,
        bytes_accessed=4 * (B_pad * K_PAD + B_pad * OUT_PAD
                            + K_PAD * HID_PAD + HID_PAD + 8 * OUT_PAD + OUT_PAD),
    )

    kernel = functools.partial(_mlp_softmax_kernel, n_valid=B)

    out_padded = pl.pallas_call(
        kernel,
        out_shape=jax.ShapeDtypeStruct((B_pad, OUT_PAD), f32),
        in_specs=[
            pl.BlockSpec(x_p.shape, lambda: (0, 0)),
            pl.BlockSpec(w1_p.shape, lambda: (0, 0)),
            pl.BlockSpec(b1_p.shape, lambda: (0, 0)),
            pl.BlockSpec(w2_p.shape, lambda: (0, 0)),
            pl.BlockSpec(b2_p.shape, lambda: (0, 0)),
        ],
        out_specs=pl.BlockSpec((B_pad, OUT_PAD), lambda: (0, 0)),
        cost_estimate=cost,
    )(x_p, w1_p, b1_p, w2_p, b2_p)

    # Kernel stores a lane-dense (B_pad, 128) slab; slice back to the real rows / 22 features.
    return out_padded[:B, :D_OUT]


def _init_params(key):
    # Deterministic init mirroring nn.Linear defaults: U(-1/sqrt(fan_in), 1/sqrt(fan_in)).
    k1, k2, k3, k4 = jax.random.split(key, 4)
    bound1 = 1.0 / jnp.sqrt(49.0)
    bound2 = 1.0 / jnp.sqrt(7.0)
    w1 = jax.random.uniform(k1, (D_HID, D_IN), jnp.float32, -bound1, bound1)
    b1 = jax.random.uniform(k2, (D_HID,), jnp.float32, -bound1, bound1)
    w2 = jax.random.uniform(k3, (D_OUT, D_HID), jnp.float32, -bound2, bound2)
    b2 = jax.random.uniform(k4, (D_OUT,), jnp.float32, -bound2, bound2)
    return w1, b1, w2, b2


if __name__ == "__main__":
    key = jax.random.PRNGKey(0)
    kx, kp = jax.random.split(key)
    w1, b1, w2, b2 = _init_params(kp)

    def ref_forward(x):
        h = x @ w1.T + b1
        h = jnp.where(h > 0, h, 0.01 * h)
        y = h @ w2.T + b2
        return jax.nn.softmax(y, axis=0)

    # Sublane-aligned batch (B=8) ...
    x8 = jax.random.normal(kx, (8, D_IN), jnp.float32)
    out8 = transduction_v_forward(x8, w1, b1, w2, b2)
    jax.block_until_ready(out8)
    assert out8.shape == (8, D_OUT)
    assert jnp.allclose(out8, ref_forward(x8), atol=1e-4, rtol=1e-4), \
        float(jnp.max(jnp.abs(out8 - ref_forward(x8))))

    # ... and an unaligned batch (B=5) to exercise the in-kernel softmax row mask.
    x5 = x8[:5]
    out5 = transduction_v_forward(x5, w1, b1, w2, b2)
    jax.block_until_ready(out5)
    assert out5.shape == (5, D_OUT)
    assert jnp.allclose(out5, ref_forward(x5), atol=1e-4, rtol=1e-4), \
        float(jnp.max(jnp.abs(out5 - ref_forward(x5))))

    print("KERNEL_OK")
</pallas_src>

<mosaic_0001>
module attributes {stable_mosaic.version = 11 : i64} {
  func.func @_mlp_softmax_kernel(%arg0: memref<8x128xf32, #tpu.memory_space<vmem>>, %arg1: memref<128x128xf32, #tpu.memory_space<vmem>>, %arg2: memref<1x128xf32, #tpu.memory_space<vmem>>, %arg3: memref<8x128xf32, #tpu.memory_space<vmem>>, %arg4: memref<1x128xf32, #tpu.memory_space<vmem>>, %arg5: memref<8x128xf32, #tpu.memory_space<vmem>>) attributes {dimension_semantics = [], scalar_prefetch = 0 : i64, scratch_operands = 0 : i64, tpu.core_type = #tpu.core_type<tc>} {
    %c0 = arith.constant 0 : index
    %c0_0 = arith.constant 0 : index
    %0 = vector.load %arg0[%c0, %c0_0] : memref<8x128xf32, #tpu.memory_space<vmem>>, vector<8x128xf32>
    %c0_1 = arith.constant 0 : index
    %c0_2 = arith.constant 0 : index
    %1 = vector.load %arg1[%c0_1, %c0_2] : memref<128x128xf32, #tpu.memory_space<vmem>>, vector<128x128xf32>
    %cst = arith.constant dense<0.000000e+00> : vector<8x128xf32>
    %2 = tpu.matmul %0, %1, %cst {dimension_numbers = #tpu.dot_dimension_numbers<[1], [0], [0], [1], [0, 0, 1, 1], [], []>} : vector<8x128xf32>, vector<128x128xf32>, vector<8x128xf32> -> vector<8x128xf32>
    %c0_3 = arith.constant 0 : index
    %c0_4 = arith.constant 0 : index
    %3 = vector.load %arg2[%c0_3, %c0_4] : memref<1x128xf32, #tpu.memory_space<vmem>>, vector<1x128xf32>
    %4 = vector.broadcast %3 : vector<1x128xf32> to vector<8x128xf32>
    %5 = arith.addf %2, %4 : vector<8x128xf32>
    %cst_5 = arith.constant 0.000000e+00 : f32
    %6 = vector.broadcast %cst_5 : f32 to vector<8x128xf32>
    %7 = arith.cmpf ogt, %5, %6 : vector<8x128xf32>
    %cst_6 = arith.constant 0.00999999977 : f32
    %8 = vector.broadcast %cst_6 : f32 to vector<8x128xf32>
    %9 = arith.mulf %8, %5 : vector<8x128xf32>
    %10 = arith.select %7, %5, %9 : vector<8x128xi1>, vector<8x128xf32>
    %c0_7 = arith.constant 0 : index
    %c0_8 = arith.constant 0 : index
    %11 = vector.load %arg4[%c0_7, %c0_8] : memref<1x128xf32, #tpu.memory_space<vmem>>, vector<1x128xf32>
    %12 = vector.shape_cast %11 : vector<1x128xf32> to vector<1x128xf32>
    %13 = vector.broadcast %12 : vector<1x128xf32> to vector<8x128xf32>
    %14 = vector.extract_strided_slice %10 {offsets = [0, 0], sizes = [8, 1], strides = [1, 1]} : vector<8x128xf32> to vector<8x1xf32>
    %c0_9 = arith.constant 0 : index
    %c0_10 = arith.constant 0 : index
    %15 = vector.load %arg3[%c0_9, %c0_10] : memref<8x128xf32, #tpu.memory_space<vmem>>, vector<1x128xf32>
    %16 = vector.broadcast %14 : vector<8x1xf32> to vector<8x128xf32>
    %17 = vector.broadcast %15 : vector<1x128xf32> to vector<8x128xf32>
    %18 = arith.mulf %16, %17 : vector<8x128xf32>
    %19 = arith.addf %13, %18 : vector<8x128xf32>
    %20 = vector.extract_strided_slice %10 {offsets = [0, 1], sizes = [8, 1], strides = [1, 1]} : vector<8x128xf32> to vector<8x1xf32>
    %c1 = arith.constant 1 : index
    %c0_11 = arith.constant 0 : index
    %21 = vector.load %arg3[%c1, %c0_11] : memref<8x128xf32, #tpu.memory_space<vmem>>, vector<1x128xf32>
    %22 = vector.broadcast %20 : vector<8x1xf32> to vector<8x128xf32>
    %23 = vector.broadcast %21 : vector<1x128xf32> to vector<8x128xf32>
    %24 = arith.mulf %22, %23 : vector<8x128xf32>
    %25 = arith.addf %19, %24 : vector<8x128xf32>
    %26 = vector.extract_strided_slice %10 {offsets = [0, 2], sizes = [8, 1], strides = [1, 1]} : vector<8x128xf32> to vector<8x1xf32>
    %c2 = arith.constant 2 : index
    %c0_12 = arith.constant 0 : index
    %27 = vector.load %arg3[%c2, %c0_12] : memref<8x128xf32, #tpu.memory_space<vmem>>, vector<1x128xf32>
    %28 = vector.broadcast %26 : vector<8x1xf32> to vector<8x128xf32>
    %29 = vector.broadcast %27 : vector<1x128xf32> to vector<8x128xf32>
    %30 = arith.mulf %28, %29 : vector<8x128xf32>
    %31 = arith.addf %25, %30 : vector<8x128xf32>
    %32 = vector.extract_strided_slice %10 {offsets = [0, 3], sizes = [8, 1], strides = [1, 1]} : vector<8x128xf32> to vector<8x1xf32>
    %c3 = arith.constant 3 : index
    %c0_13 = arith.constant 0 : index
    %33 = vector.load %arg3[%c3, %c0_13] : memref<8x128xf32, #tpu.memory_space<vmem>>, vector<1x128xf32>
    %34 = vector.broadcast %32 : vector<8x1xf32> to vector<8x128xf32>
    %35 = vector.broadcast %33 : vector<1x128xf32> to vector<8x128xf32>
    %36 = arith.mulf %34, %35 : vector<8x128xf32>
    %37 = arith.addf %31, %36 : vector<8x128xf32>
    %38 = vector.extract_strided_slice %10 {offsets = [0, 4], sizes = [8, 1], strides = [1, 1]} : vector<8x128xf32> to vector<8x1xf32>
    %c4 = arith.constant 4 : index
    %c0_14 = arith.constant 0 : index
    %39 = vector.load %arg3[%c4, %c0_14] : memref<8x128xf32, #tpu.memory_space<vmem>>, vector<1x128xf32>
    %40 = vector.broadcast %38 : vector<8x1xf32> to vector<8x128xf32>
    %41 = vector.broadcast %39 : vector<1x128xf32> to vector<8x128xf32>
    %42 = arith.mulf %40, %41 : vector<8x128xf32>
    %43 = arith.addf %37, %42 : vector<8x128xf32>
    %44 = vector.extract_strided_slice %10 {offsets = [0, 5], sizes = [8, 1], strides = [1, 1]} : vector<8x128xf32> to vector<8x1xf32>
    %c5 = arith.constant 5 : index
    %c0_15 = arith.constant 0 : index
    %45 = vector.load %arg3[%c5, %c0_15] : memref<8x128xf32, #tpu.memory_space<vmem>>, vector<1x128xf32>
    %46 = vector.broadcast %44 : vector<8x1xf32> to vector<8x128xf32>
    %47 = vector.broadcast %45 : vector<1x128xf32> to vector<8x128xf32>
    %48 = arith.mulf %46, %47 : vector<8x128xf32>
    %49 = arith.addf %43, %48 : vector<8x128xf32>
    %50 = vector.extract_strided_slice %10 {offsets = [0, 6], sizes = [8, 1], strides = [1, 1]} : vector<8x128xf32> to vector<8x1xf32>
    %c6 = arith.constant 6 : index
    %c0_16 = arith.constant 0 : index
    %51 = vector.load %arg3[%c6, %c0_16] : memref<8x128xf32, #tpu.memory_space<vmem>>, vector<1x128xf32>
    %52 = vector.broadcast %50 : vector<8x1xf32> to vector<8x128xf32>
    %53 = vector.broadcast %51 : vector<1x128xf32> to vector<8x128xf32>
    %54 = arith.mulf %52, %53 : vector<8x128xf32>
    %55 = arith.addf %49, %54 : vector<8x128xf32>
    %cst_17 = arith.constant dense<0xFF800000> : vector<128xf32>
    %56 = vector.multi_reduction <maximumf>, %55, %cst_17 [0] : vector<8x128xf32> to vector<128xf32>
    %57 = vector.shape_cast %56 : vector<128xf32> to vector<1x128xf32>
    %58 = vector.broadcast %57 : vector<1x128xf32> to vector<8x128xf32>
    %59 = arith.subf %55, %58 : vector<8x128xf32>
    %60 = math.exp %59 : vector<8x128xf32>
    %cst_18 = arith.constant dense<0.000000e+00> : vector<128xf32>
    %61 = vector.multi_reduction <add>, %60, %cst_18 [0] : vector<8x128xf32> to vector<128xf32>
    %62 = vector.shape_cast %61 : vector<128xf32> to vector<1x128xf32>
    %63 = tpu.reciprocal %62 {approx = true} : vector<1x128xf32> -> vector<1x128xf32>
    %64 = arith.mulf %62, %63 : vector<1x128xf32>
    %cst_19 = arith.constant 2.000000e+00 : f32
    %65 = vector.broadcast %cst_19 : f32 to vector<1x128xf32>
    %66 = arith.subf %65, %64 : vector<1x128xf32>
    %67 = arith.mulf %63, %66 : vector<1x128xf32>
    %68 = vector.broadcast %67 : vector<1x128xf32> to vector<8x128xf32>
    %69 = arith.mulf %60, %68 : vector<8x128xf32>
    %c0_20 = arith.constant 0 : index
    %c0_21 = arith.constant 0 : index
    %70 = vector.load %arg5[%c0_20, %c0_21] : memref<8x128xf32, #tpu.memory_space<vmem>>, vector<8x128xf32>
    tpu.vector_store %arg5[%c0_20, %c0_21], %69 {strides = array<i32>} : memref<8x128xf32, #tpu.memory_space<vmem>>, vector<8x128xf32>,
    return
  }
}

</mosaic_0001>

<llo_original>
// kernel: tpu_custom_call.1
$region0: #{tpu_custom_call.1}
  #allocation0 [shape = 'u32[]', space=smem, size = 0x4, offset = 0x4, fixed_abs, tag = 'smem constant byte address 0x4 - core index']
  #allocation1 [shape = 'u32[144,128]{1,0:T(1,128)}', space=vmem, size = 0x12000, scoped, tag = 'internal scratch']
  %s0 = inlined_call_operand.hbm [shape: f32[8,128], index: 0, kind: input, shape index: {}]
  %s1 = inlined_call_operand.hbm [shape: f32[128,128], index: 1, kind: input, shape index: {}]
  %s2 = inlined_call_operand.vmem [shape: f32[1,128], index: 2, kind: input, shape index: {}]
  %s3 = inlined_call_operand.vmem [shape: f32[8,128], index: 3, kind: input, shape index: {}]
  %s4 = inlined_call_operand.vmem [shape: f32[1,128], index: 4, kind: input, shape index: {}]
  %s5 = inlined_call_operand.hbm [shape: f32[8,128], index: 5, kind: output, shape index: {}]
  %s6 = sld [smem:[#allocation0]]
  $region38: #{tpu_custom_call.1} parent=0
    _
  %s8 = ssub.s32 1, %s6
  %s9 = scalar_select 0, %s8, %s6
  $region1: #{tpu_custom_call.1} parent=0
    #allocation2 [shape = 'u8[4096]{0}', space=vmem, size = 0x1000, scoped, tag = 'input window, operand 0, single buffered']
    #allocation3 [shape = 's32[1]{0}', space=sflag, size = 0x4, scoped, tag = 'scoped memory for tpu_custom_call.1']
    #allocation4 [shape = 's32[1]{0}', space=sflag, size = 0x4, scoped, tag = 'scoped memory for tpu_custom_call.1']
    #allocation5 [shape = 'u8[65536]{0}', space=vmem, size = 0x10000, scoped, tag = 'input window, operand 1, single buffered']
    #allocation6 [shape = 's32[1]{0}', space=sflag, size = 0x4, scoped, tag = 'scoped memory for tpu_custom_call.1']
    #allocation7 [shape = 'u8[4096]{0}', space=vmem, size = 0x1000, scoped, tag = 'output window, operand 0, single buffered']
    %10 = vsyncpa [#allocation3], 0
    %11 = vsyncpa [#allocation6], 0
    %12 = vsyncpa [#allocation4], 0
    // Predicated region
    $region2: #{tpu_custom_call.1} parent=1 // pred_check
      _
    $region3: #{tpu_custom_call.1} parent=1 // pred_check_branch
      %14 = sbr.rel (0) target = $region5
    $region4: #{tpu_custom_call.1} parent=1 // pred_region
      %s16 = ssub.s32 128, 128
      %17 = vsyncadd [#allocation3], %s16
      %s19 = sshll.u32 [#allocation2], 4
      %s20 = int_to_ptr.vmem [resolvable:$true] %s19
      %22 = dma.hbm_to_vmem [thread:$0]  %s0, 128, %s20, [#allocation3]
    $region5: #{tpu_custom_call.1} parent=1 // pred_fallthru
      _
    // Predicated region
    $region6: #{tpu_custom_call.1} parent=1 // pred_check
      _
    $region7: #{tpu_custom_call.1} parent=1 // pred_check_branch
      %24 = sbr.rel (0) target = $region9
    $region8: #{tpu_custom_call.1} parent=1 // pred_region
      %s26 = ssub.s32 2048, 2048
      %27 = vsyncadd [#allocation6], %s26
      %s28 = sshll.u32 [#allocation5], 4
      %s29 = int_to_ptr.vmem [resolvable:$true] %s28
      %34 = dma.hbm_to_vmem [thread:$0]  %s1, 2048, %s29, [#allocation6], 128, 128, 8
    $region9: #{tpu_custom_call.1} parent=1 // pred_fallthru
      _
    // Predicated region
    $region10: #{tpu_custom_call.1} parent=1 // pred_check
      _
    $region11: #{tpu_custom_call.1} parent=1 // pred_check_branch
      %36 = sbr.rel (0) target = $region13
    $region12: #{tpu_custom_call.1} parent=1 // pred_region
      _
    $region13: #{tpu_custom_call.1} parent=1 // pred_fallthru
      _
    // Predicated region
    $region14: #{tpu_custom_call.1} parent=1 // pred_check
      _
    $region15: #{tpu_custom_call.1} parent=1 // pred_check_branch
      %38 = sbr.rel (0) target = $region17
    $region16: #{tpu_custom_call.1} parent=1 // pred_region
      _
    $region17: #{tpu_custom_call.1} parent=1 // pred_fallthru
      _
    // Predicated region
    $region18: #{tpu_custom_call.1} parent=1 // pred_check
      _
    $region19: #{tpu_custom_call.1} parent=1 // pred_check_branch
      %40 = sbr.rel (0) target = $region21
    $region20: #{tpu_custom_call.1} parent=1 // pred_region
      _
    $region21: #{tpu_custom_call.1} parent=1 // pred_fallthru
      _
    // Predicated region
    $region22: #{tpu_custom_call.1} parent=1 // pred_check
      _
    $region23: #{tpu_custom_call.1} parent=1 // pred_check_branch
      %42 = sbr.rel (0) target = $region25
    $region24: #{tpu_custom_call.1} parent=1 // pred_region
      %43 = dma.done [#allocation3], 128
    $region25: #{tpu_custom_call.1} parent=1 // pred_fallthru
      _
    // Predicated region
    $region26: #{tpu_custom_call.1} parent=1 // pred_check
      _
    $region27: #{tpu_custom_call.1} parent=1 // pred_check_branch
      %45 = sbr.rel (0) target = $region29
    $region28: #{tpu_custom_call.1} parent=1 // pred_region
      %46 = dma.done [#allocation6], 2048
    $region29: #{tpu_custom_call.1} parent=1 // pred_fallthru
      _
    %v47 = vld [vmem:[#allocation2] sm:$0xff]
    %v48 = vld [vmem:[#allocation5] sm:$0xff]
    %v49 = vld [vmem:[#allocation5 + $0x8] sm:$0xff]
    %v50 = vld [vmem:[#allocation5 + $0x10] sm:$0xff]
    %v51 = vld [vmem:[#allocation5 + $0x18] sm:$0xff]
    %v52 = vld [vmem:[#allocation5 + $0x20] sm:$0xff]
    %v53 = vld [vmem:[#allocation5 + $0x28] sm:$0xff]
    %v54 = vld [vmem:[#allocation5 + $0x30] sm:$0xff]
    %v55 = vld [vmem:[#allocation5 + $0x38] sm:$0xff]
    %v56 = vld [vmem:[#allocation5 + $0x40] sm:$0xff]
    %v57 = vld [vmem:[#allocation5 + $0x48] sm:$0xff]
    %v58 = vld [vmem:[#allocation5 + $0x50] sm:$0xff]
    %v59 = vld [vmem:[#allocation5 + $0x58] sm:$0xff]
    %v60 = vld [vmem:[#allocation5 + $0x60] sm:$0xff]
    %v61 = vld [vmem:[#allocation5 + $0x68] sm:$0xff]
    %v62 = vld [vmem:[#allocation5 + $0x70] sm:$0xff]
    %v63 = vld [vmem:[#allocation5 + $0x78] sm:$0xff]
    %v64 = vld [vmem:[%s2] sm:$0x1]
    %v66 = vlaneseq
    %v67 = vshrl.u32 %v66, 7
    %v68 = vsub.s32 0, %v67
    %v69 = vrot.slane %v64, %v68
    %71 = vmatprep.subr.mxu0 0.0
    %72 = vmatpush1.msra.mxu0 %v48
    %73 = vmatprep.subr.mxu0 0.0
    %74 = vmatpush1.msra.mxu0 %v49
    %75 = vmatprep.subr.mxu0 0.0
    %76 = vmatpush1.msra.mxu0 %v50
    %77 = vmatprep.subr.mxu0 0.0
    %78 = vmatpush1.msra.mxu0 %v51
    %79 = vmatprep.subr.mxu0 0.0
    %80 = vmatpush1.msra.mxu0 %v52
    %81 = vmatprep.subr.mxu0 0.0
    %82 = vmatpush1.msra.mxu0 %v53
    %83 = vmatprep.subr.mxu0 0.0
    %84 = vmatpush1.msra.mxu0 %v54
    %85 = vmatprep.subr.mxu0 0.0
    %86 = vmatpush1.msra.mxu0 %v55
    %87 = vmatprep.subr.mxu0 0.0
    %88 = vmatpush1.msra.mxu0 %v56
    %89 = vmatprep.subr.mxu0 0.0
    %90 = vmatpush1.msra.mxu0 %v57
    %91 = vmatprep.subr.mxu0 0.0
    %92 = vmatpush1.msra.mxu0 %v58
    %93 = vmatprep.subr.mxu0 0.0
    %94 = vmatpush1.msra.mxu0 %v59
    %95 = vmatprep.subr.mxu0 0.0
    %96 = vmatpush1.msra.mxu0 %v60
    %97 = vmatprep.subr.mxu0 0.0
    %98 = vmatpush1.msra.mxu0 %v61
    %99 = vmatprep.subr.mxu0 0.0
    %100 = vmatpush1.msra.mxu0 %v62
    %101 = vmatprep.subr.mxu0 0.0
    %102 = vmatpush1.msra.mxu0 %v63
    %103 = vmatprep.subr.mxu0 0.0
    %104 = vmatpush1.msra.mxu0 0.0
    %105 = vmatprep.subr.mxu0 0.0
    %106 = vmatpush1.msra.mxu0 0.0
    %107 = vmatprep.subr.mxu0 0.0
    %108 = vmatpush1.msra.mxu0 0.0
    %109 = vmatprep.subr.mxu0 0.0
    %110 = vmatpush1.msra.mxu0 0.0
    %111 = vmatprep.subr.mxu0 0.0
    %112 = vmatpush1.msra.mxu0 0.0
    %113 = vmatprep.subr.mxu0 0.0
    %114 = vmatpush1.msra.mxu0 0.0
    %115 = vmatprep.subr.mxu0 0.0
    %116 = vmatpush1.msra.mxu0 0.0
    %117 = vmatprep.subr.mxu0 0.0
    %118 = vmatpush1.msra.mxu0 0.0
    %119 = vmatprep.subr.mxu0 0.0
    %120 = vmatpush1.msra.mxu0 0.0
    %121 = vmatprep.subr.mxu0 0.0
    %122 = vmatpush1.msra.mxu0 0.0
    %123 = vmatprep.subr.mxu0 0.0
    %124 = vmatpush1.msra.mxu0 0.0
    %125 = vmatprep.subr.mxu0 0.0
    %126 = vmatpush1.msra.mxu0 0.0
    %127 = vmatprep.subr.mxu0 0.0
    %128 = vmatpush1.msra.mxu0 0.0
    %129 = vmatprep.subr.mxu0 0.0
    %130 = vmatpush1.msra.mxu0 0.0
    %131 = vmatprep.subr.mxu0 0.0
    %132 = vmatpush1.msra.mxu0 0.0
    %133 = vmatprep.subr.mxu0 0.0
    %134 = vmatpush1.msra.mxu0 0.0
    %135 = vmatprep.mubr.f32.mxu0 0.0
    %136 = vmatmul.mubr.f32.gmra.mrb[0].mxu0 %v47
    %v137 = vpop.f32.mrb[0].mxu0
    %v138 = vadd.f32 %v69, %v137
    %v139 = vpop.f32.mrb[0].mxu0
    %140 = vdwg.mxu0
    %vm141 = vcmp.gt.f32.partialorder %v138, 0.0
    %v142 = vmul.f32 %v138, 0.01
    %v143 = vsel %vm141, %v138, %v142
    %v144 = vld [vmem:[%s4] sm:$0x1]
    %v146 = vlaneseq
    %v147 = vshrl.u32 %v146, 7
    %v148 = vsub.s32 0, %v147
    %v149 = vrot.slane %v144, %v148
    %v151 = vld [vmem:[%s3] sm:$0x1]
    %153 = vset.pattern.permute.xlu0 0
    %154 = vperm.xlu0 %153, %v143
    %v155 = vpop.permute.xlu0 %154
    %v157 = vlaneseq
    %v158 = vshrl.u32 %v157, 7
    %v159 = vsub.s32 0, %v158
    %v160 = vrot.slane %v151, %v159
    %v161 = vmul.f32 %v155, %v160
    %v162 = vadd.f32 %v149, %v161
    %v163 = vld [vmem:[%s3 + $0x1] sm:$0x1]
    %164 = vset.pattern.permute.xlu0 1
    %165 = vperm.xlu0 %164, %v143
    %v166 = vpop.permute.xlu0 %165
    %v168 = vlaneseq
    %v169 = vshrl.u32 %v168, 7
    %v170 = vsub.s32 0, %v169
    %v171 = vrot.slane %v163, %v170
    %v172 = vmul.f32 %v166, %v171
    %v173 = vadd.f32 %v162, %v172
    %v174 = vld [vmem:[%s3 + $0x2] sm:$0x1]
    %175 = vset.pattern.permute.xlu0 2
    %176 = vperm.xlu0 %175, %v143
    %v177 = vpop.permute.xlu0 %176
    %v179 = vlaneseq
    %v180 = vshrl.u32 %v179, 7
    %v181 = vsub.s32 0, %v180
    %v182 = vrot.slane %v174, %v181
    %v183 = vmul.f32 %v177, %v182
    %v184 = vadd.f32 %v173, %v183
    %v185 = vld [vmem:[%s3 + $0x3] sm:$0x1]
    %186 = vset.pattern.permute.xlu0 3
    %187 = vperm.xlu0 %186, %v143
    %v188 = vpop.permute.xlu0 %187
    %v190 = vlaneseq
    %v191 = vshrl.u32 %v190, 7
    %v192 = vsub.s32 0, %v191
    %v193 = vrot.slane %v185, %v192
    %v194 = vmul.f32 %v188, %v193
    %v195 = vadd.f32 %v184, %v194
    %v196 = vld [vmem:[%s3 + $0x4] sm:$0x1]
    %197 = vset.pattern.permute.xlu0 4
    %198 = vperm.xlu0 %197, %v143
    %v199 = vpop.permute.xlu0 %198
    %v201 = vlaneseq
    %v202 = vshrl.u32 %v201, 7
    %v203 = vsub.s32 0, %v202
    %v204 = vrot.slane %v196, %v203
    %v205 = vmul.f32 %v199, %v204
    %v206 = vadd.f32 %v195, %v205
    %v207 = vld [vmem:[%s3 + $0x5] sm:$0x1]
    %208 = vset.pattern.permute.xlu0 5
    %209 = vperm.xlu0 %208, %v143
    %v210 = vpop.permute.xlu0 %209
    %v212 = vlaneseq
    %v213 = vshrl.u32 %v212, 7
    %v214 = vsub.s32 0, %v213
    %v215 = vrot.slane %v207, %v214
    %v216 = vmul.f32 %v210, %v215
    %v217 = vadd.f32 %v206, %v216
    %v218 = vld [vmem:[%s3 + $0x6] sm:$0x1]
    %219 = vset.pattern.permute.xlu0 6
    %220 = vperm.xlu0 %219, %v143
    %v221 = vpop.permute.xlu0 %220
    %v223 = vlaneseq
    %v224 = vshrl.u32 %v223, 7
    %v225 = vsub.s32 0, %v224
    %v226 = vrot.slane %v218, %v225
    %v227 = vmul.f32 %v221, %v226
    %v228 = vadd.f32 %v217, %v227
    %v229 = vrot.slane %v228, 4
    %v230 = vmax.f32 %v228, %v229
    %v231 = vrot.slane %v230, 2
    %v232 = vmax.f32 %v230, %v231
    %v233 = vrot.slane %v232, 1
    %v234 = vmax.f32 %v232, %v233
    %v235 = vsub.f32 %v228, %v234
    %v236 = vmul.f32 %v235, 1.442695
    %v237 = vpow.pop %v236
    %v238 = vrot.slane %v237, 4
    %v239 = vadd.f32 %v237, %v238
    %v240 = vrot.slane %v239, 2
    %v241 = vadd.f32 %v239, %v240
    %v242 = vrot.slane %v241, 1
    %v243 = vadd.f32 %v241, %v242
    %v244 = vrcp.pop %v243
    %v245 = vmul.f32 %v243, %v244
    %v246 = vsub.f32 2.0, %v245
    %v247 = vmul.f32 %v244, %v246
    %v248 = vmul.f32 %v237, %v247
    %249 = vst [vmem:[#allocation7] sm:$0xff] %v248
    // Predicated region
    $region30: #{tpu_custom_call.1} parent=1 // pred_check
      _
    $region31: #{tpu_custom_call.1} parent=1 // pred_check_branch
      %251 = sbr.rel (0) target = $region33
    $region32: #{tpu_custom_call.1} parent=1 // pred_region
      %s253 = ssub.s32 128, 128
      %254 = vsyncadd [#allocation4], %s253
      %s256 = sshll.u32 [#allocation7], 4
      %s257 = int_to_ptr.vmem [resolvable:$true] %s256
      %259 = dma.vmem_to_hbm [thread:$0]  %s257, 128, %s5, [#allocation4]
    $region33: #{tpu_custom_call.1} parent=1 // pred_fallthru
      _
    // Predicated region
    $region34: #{tpu_custom_call.1} parent=1 // pred_check
      _
    $region35: #{tpu_custom_call.1} parent=1 // pred_check_branch
      %261 = sbr.rel (0) target = $region37
    $region36: #{tpu_custom_call.1} parent=1 // pred_region
      %262 = dma.done [#allocation4], 128
    $region37: #{tpu_custom_call.1} parent=1 // pred_fallthru
      _
    %263 = vsyncpa [#allocation3], 1
    %264 = vsyncpa [#allocation6], 1
    %265 = vsyncpa [#allocation4], 1

</llo_original>
